<compile_context>
chip_gen: v6e
topology: v6e:2x2x1
jax: 0.10.0
libtpu: 0.0.40
codegen_flags: <defaults>
</compile_context>

<pallas_src>
import jax
import jax.numpy as jnp
import numpy as np
from jax.experimental import pallas as pl
from jax.experimental.pallas import tpu as pltpu

EMB_DIM = 32                      # emb_dim (small test size; module default 256)
HID = 4 * EMB_DIM                 # 128
VOCAB = (40, 40, 48)              # vocab_size[0], vocab_size[1], vocab_size[2]
MAX_IDS = 16                      # padded per-visit code-list length (per stream)
NSLOT = 2 * MAX_IDS               # 32 id slots per visit: [diag | prod(+V0)]
NCOL = 128                        # lane-padded count-hot width (>= V0+V1=80)
PAD_COL = NCOL - 1                # sentinel column -> all-zero table row
DEL_OFF = 128                     # lane offset of the delete head in the output
OUT_PAD = 256                     # lane-dense output width (2 * 128)
BM = 8                            # batch rows per grid step (one sublane tile)

assert VOCAB[0] + VOCAB[1] <= NCOL and VOCAB[2] <= DEL_OFF and 2 * HID == OUT_PAD


def dualnn_kernel(ids_ref, tab_ref, wh_ref, w1_ref, w2_ref, b_ref, out_ref):
    """Fused DualNN forward for one (BM,)-row batch tile.

    ids_ref: VMEM i32 (BM, NSLOT)    diag ids | prod ids (+V0); pad = PAD_COL
    tab_ref: VMEM bf16 (NCOL, 2E)    rows 0:40 [emb0|0], 40:80 [0|emb1], rest 0
    wh_ref : VMEM bf16 (2E, E)       health_net weight
    w1_ref : VMEM bf16 (E, 2H)       wa1 || wd1
    w2_ref : VMEM bf16 (2, H, 128)   slab0 = wa2 lane-padded, slab1 = wd2
    b_ref  : VMEM f32 (3, OUT_PAD)   row0[:E]=bh, row1=ba1||bd1, row2=ba2/bd2
    out_ref: VMEM f32 (BM, OUT_PAD)  cols 0:V2 = add logits, 128:128+V2 = delete
    """
    E, H = EMB_DIM, HID
    ids = ids_ref[...]                                              # (BM, NSLOT)
    iota = jax.lax.broadcasted_iota(jnp.int32, (BM, NCOL), 1)

    # Count-hot over the packed vocab lanes (multi-hot with multiplicity).
    # 4 partial accumulators keep the f32 add chain short.
    acc = [jnp.zeros((BM, NCOL), jnp.float32) for _ in range(4)]
    for j in range(NSLOT):
        acc[j % 4] = acc[j % 4] + (iota == ids[:, j:j + 1]).astype(jnp.float32)
    counthot = ((acc[0] + acc[1]) + (acc[2] + acc[3])).astype(jnp.bfloat16)

    # Embedding gather+sum+concat as one MXU op: (BM,128) @ (128,2E)
    hsum = jnp.dot(counthot, tab_ref[...],
                   preferred_element_type=jnp.float32)              # (BM, 2E)

    # health_net
    rep = (jnp.dot(hsum.astype(jnp.bfloat16), wh_ref[...],
                   preferred_element_type=jnp.float32)
           + b_ref[0:1, 0:E])                                       # (BM, E)

    # add_net / delete_net first layers fused: one (BM,E)x(E,2H) matmul + ReLU.
    h1 = jnp.maximum(
        jnp.dot(rep.astype(jnp.bfloat16), w1_ref[...],
                preferred_element_type=jnp.float32) + b_ref[1:2, :], 0.0)
    h1b = h1.astype(jnp.bfloat16)                                   # (BM, 2H)

    # Second layers: two lane-padded (H,128) slabs -> two lane-aligned stores.
    out_ref[:, 0:DEL_OFF] = (
        jnp.dot(h1b[:, :H], w2_ref[0], preferred_element_type=jnp.float32)
        + b_ref[2:3, 0:DEL_OFF])
    out_ref[:, DEL_OFF:OUT_PAD] = (
        jnp.dot(h1b[:, H:], w2_ref[1], preferred_element_type=jnp.float32)
        + b_ref[2:3, DEL_OFF:OUT_PAD])


def init_params(key, emb_dim=EMB_DIM, vocab=VOCAB):
    ks = jax.random.split(key, 12)

    def lin(kw, kb, fan_in, fan_out):
        # PyTorch nn.Linear default init: U(-1/sqrt(fan_in), 1/sqrt(fan_in)).
        # NOTE: stored (fan_in, fan_out); a real PyTorch checkpoint (out, in)
        # must be transposed when imported.
        bound = 1.0 / float(fan_in) ** 0.5
        w = jax.random.uniform(kw, (fan_in, fan_out), jnp.float32, -bound, bound)
        b = jax.random.uniform(kb, (1, fan_out), jnp.float32, -bound, bound)
        return w, b

    params = {}
    # embeddings: uniform(-0.1, 0.1), per init_weights()
    params["emb0"] = jax.random.uniform(ks[0], (vocab[0], emb_dim), jnp.float32, -0.1, 0.1)
    params["emb1"] = jax.random.uniform(ks[1], (vocab[1], emb_dim), jnp.float32, -0.1, 0.1)
    params["wh"], params["bh"] = lin(ks[2], ks[3], 2 * emb_dim, emb_dim)
    params["wa1"], params["ba1"] = lin(ks[4], ks[5], emb_dim, 4 * emb_dim)
    params["wa2"], params["ba2"] = lin(ks[6], ks[7], 4 * emb_dim, vocab[2])
    params["wd1"], params["bd1"] = lin(ks[8], ks[9], emb_dim, 4 * emb_dim)
    params["wd2"], params["bd2"] = lin(ks[10], ks[11], 4 * emb_dim, vocab[2])
    return params


def pack_params(params):
    """One-time host-side packing of 11 operands into 5 slabs (weights bf16)."""
    E, H, V0, V1, V2 = EMB_DIM, HID, VOCAB[0], VOCAB[1], VOCAB[2]

    # Block-structured embedding table: row r<V0 -> [emb0[r] | 0],
    # V0<=r<V0+V1 -> [0 | emb1[r-V0]], remaining rows (incl. PAD_COL) are zero.
    tab = jnp.zeros((NCOL, 2 * E), jnp.float32)
    tab = tab.at[:V0, :E].set(params["emb0"])
    tab = tab.at[V0:V0 + V1, E:].set(params["emb1"])

    w1 = jnp.concatenate([params["wa1"], params["wd1"]], axis=1)    # (E, 2H)

    w2 = jnp.zeros((2, H, DEL_OFF), jnp.float32)                    # two (128,128) slabs
    w2 = w2.at[0, :, :V2].set(params["wa2"])
    w2 = w2.at[1, :, :V2].set(params["wd2"])

    bias = jnp.zeros((3, OUT_PAD), jnp.float32)
    bias = bias.at[0, :E].set(params["bh"][0])
    bias = bias.at[1, :H].set(params["ba1"][0])
    bias = bias.at[1, H:2 * H].set(params["bd1"][0])
    bias = bias.at[2, :V2].set(params["ba2"][0])
    bias = bias.at[2, DEL_OFF:DEL_OFF + V2].set(params["bd2"][0])

    return {"tab": tab.astype(jnp.bfloat16),
            "wh": params["wh"].astype(jnp.bfloat16),
            "w1": w1.astype(jnp.bfloat16),
            "w2": w2.astype(jnp.bfloat16),
            "bias": bias}


def pack_visit_ids(diag_codes, prod_codes):
    """Host-side (numpy) packing of one visit into a fixed-shape int32 row.

    Fixed shape => one jit compile regardless of per-visit list lengths.
    Empty lists get code 0 appended, matching the module's forward().
    Pad slots get PAD_COL, which maps to an all-zero table row (no mask needed).
    """
    diag = list(diag_codes) if len(diag_codes) else [0]
    prod = list(prod_codes) if len(prod_codes) else [0]
    assert len(diag) <= MAX_IDS and len(prod) <= MAX_IDS
    row = np.full((NSLOT,), PAD_COL, np.int32)
    row[:len(diag)] = np.asarray(diag, np.int32)
    row[MAX_IDS:MAX_IDS + len(prod)] = np.asarray(prod, np.int32) + VOCAB[0]
    return row


@jax.jit
def dualnn_forward(ids, packed):
    """ids: int32 (B, NSLOT) from pack_visit_ids; returns (add, delete) logits."""
    B = ids.shape[0]
    B_pad = ((B + BM - 1) // BM) * BM
    if B_pad != B:
        ids = jnp.concatenate(
            [ids, jnp.full((B_pad - B, NSLOT), PAD_COL, jnp.int32)], axis=0)

    const2 = lambda i: (0, 0)
    flops = B_pad * 2 * (NCOL * 2 * EMB_DIM + 2 * EMB_DIM * EMB_DIM
                         + EMB_DIM * 2 * HID + 2 * HID * DEL_OFF)
    nbytes = (2 * (NCOL * 2 * EMB_DIM + 2 * EMB_DIM * EMB_DIM
                   + EMB_DIM * 2 * HID + 2 * HID * DEL_OFF)     # bf16 weights
              + 4 * 3 * OUT_PAD                                 # f32 bias
              + 4 * B_pad * (NSLOT + OUT_PAD))                  # ids + out

    out = pl.pallas_call(
        dualnn_kernel,
        out_shape=jax.ShapeDtypeStruct((B_pad, OUT_PAD), jnp.float32),
        grid=(B_pad // BM,),
        in_specs=[
            pl.BlockSpec((BM, NSLOT), lambda i: (i, 0)),             # ids (per tile)
            pl.BlockSpec((NCOL, 2 * EMB_DIM), const2),               # tab (resident)
            pl.BlockSpec((2 * EMB_DIM, EMB_DIM), const2),            # wh
            pl.BlockSpec((EMB_DIM, 2 * HID), const2),                # w1
            pl.BlockSpec((2, HID, DEL_OFF), lambda i: (0, 0, 0)),    # w2
            pl.BlockSpec((3, OUT_PAD), const2),                      # biases
        ],
        out_specs=pl.BlockSpec((BM, OUT_PAD), lambda i: (i, 0)),
        compiler_params=pltpu.CompilerParams(
            dimension_semantics=("parallel",)),
        cost_estimate=pl.CostEstimate(flops=flops, transcendentals=0,
                                      bytes_accessed=nbytes),
    )(ids, packed["tab"], packed["wh"], packed["w1"], packed["w2"], packed["bias"])

    add = out[:B, :VOCAB[2]]
    dele = out[:B, DEL_OFF:DEL_OFF + VOCAB[2]]
    return add, dele


def dualnn_reference(diag_ids, prod_ids, params):
    """Pure-JAX f32 reference of the module's forward (eval mode)."""
    diag_sum = jnp.take(params["emb0"], diag_ids, axis=0).sum(axis=0, keepdims=True)
    prod_sum = jnp.take(params["emb1"], prod_ids, axis=0).sum(axis=0, keepdims=True)
    h = jnp.concatenate([diag_sum, prod_sum], axis=-1)
    rep = h @ params["wh"] + params["bh"]
    add = jnp.maximum(rep @ params["wa1"] + params["ba1"], 0.0) @ params["wa2"] + params["ba2"]
    dele = jnp.maximum(rep @ params["wd1"] + params["bd1"], 0.0) @ params["wd2"] + params["bd2"]
    return add, dele


if __name__ == "__main__":
    key = jax.random.PRNGKey(0)
    k_par, k_len, k_diag, k_prod = jax.random.split(key, 4)
    params = init_params(k_par)
    packed = pack_params(params)

    # A batch of B visits (input[-1][0]/input[-1][1] per visit), variable lengths.
    B = 16
    lens = np.asarray(jax.random.randint(k_len, (B, 2), 0, MAX_IDS + 1))
    diag_codes = np.asarray(jax.random.randint(k_diag, (B, MAX_IDS), 0, VOCAB[0]))
    prod_codes = np.asarray(jax.random.randint(k_prod, (B, MAX_IDS), 0, VOCAB[1]))

    visits = []
    for b in range(B):
        nd, npr = int(lens[b, 0]), int(lens[b, 1])
        visits.append((list(diag_codes[b, :nd]), list(prod_codes[b, :npr])))
    visits[1] = ([], list(prod_codes[1, :3]))   # exercise the empty-list -> [0] path

    ids = jnp.asarray(np.stack([pack_visit_ids(d, p) for d, p in visits]))

    add_out, del_out = dualnn_forward(ids, packed)
    jax.block_until_ready((add_out, del_out))
    assert add_out.shape == (B, VOCAB[2]) and del_out.shape == (B, VOCAB[2])

    # Per-visit f32 reference (bf16 weights in the kernel -> relaxed tolerance).
    ok = True
    for b, (d, p) in enumerate(visits):
        d = d if len(d) else [0]
        p = p if len(p) else [0]
        ra, rd = dualnn_reference(jnp.asarray(d, jnp.int32),
                                  jnp.asarray(p, jnp.int32), params)
        ok &= bool(jnp.allclose(add_out[b:b + 1], ra, atol=2e-2, rtol=2e-2))
        ok &= bool(jnp.allclose(del_out[b:b + 1], rd, atol=2e-2, rtol=2e-2))
    assert ok

    print("KERNEL_OK")
</pallas_src>

<mosaic_0001>
module attributes {stable_mosaic.version = 11 : i64} {
  func.func @dualnn_kernel(%arg0: i32, %arg1: memref<8x32xi32, #tpu.memory_space<vmem>>, %arg2: memref<128x64xbf16, #tpu.memory_space<vmem>>, %arg3: memref<64x32xbf16, #tpu.memory_space<vmem>>, %arg4: memref<32x256xbf16, #tpu.memory_space<vmem>>, %arg5: memref<2x128x128xbf16, #tpu.memory_space<vmem>>, %arg6: memref<3x256xf32, #tpu.memory_space<vmem>>, %arg7: memref<8x256xf32, #tpu.memory_space<vmem>>) attributes {dimension_semantics = [#tpu.dimension_semantics<parallel>], iteration_bounds = array<i64: 2>, scalar_prefetch = 0 : i64, scratch_operands = 0 : i64, tpu.core_type = #tpu.core_type<tc>, window_params = [{transform_indices = @transform_0, window_bounds = array<i64: 8, 32>}, {pipeline_mode = #tpu.pipeline_mode<synchronous>, transform_indices = @transform_1, window_bounds = array<i64: 128, 64>}, {pipeline_mode = #tpu.pipeline_mode<synchronous>, transform_indices = @transform_2, window_bounds = array<i64: 64, 32>}, {pipeline_mode = #tpu.pipeline_mode<synchronous>, transform_indices = @transform_3, window_bounds = array<i64: 32, 256>}, {pipeline_mode = #tpu.pipeline_mode<synchronous>, transform_indices = @transform_4, window_bounds = array<i64: 2, 128, 128>}, {pipeline_mode = #tpu.pipeline_mode<synchronous>, transform_indices = @transform_5, window_bounds = array<i64: 3, 256>}, {transform_indices = @transform_6, window_bounds = array<i64: 8, 256>}]} {
    %c0 = arith.constant 0 : index
    %c0_0 = arith.constant 0 : index
    %0 = vector.load %arg1[%c0, %c0_0] : memref<8x32xi32, #tpu.memory_space<vmem>>, vector<8x32xi32>
    %1 = tpu.iota {dimensions = array<i32: 1>} : vector<8x128xi32>
    %cst = arith.constant 0.000000e+00 : f32
    %2 = vector.broadcast %cst : f32 to vector<8x128xf32>
    %cst_1 = arith.constant 0.000000e+00 : f32
    %3 = vector.broadcast %cst_1 : f32 to vector<8x128xf32>
    %cst_2 = arith.constant 0.000000e+00 : f32
    %4 = vector.broadcast %cst_2 : f32 to vector<8x128xf32>
    %cst_3 = arith.constant 0.000000e+00 : f32
    %5 = vector.broadcast %cst_3 : f32 to vector<8x128xf32>
    %6 = vector.extract_strided_slice %0 {offsets = [0, 0], sizes = [8, 1], strides = [1, 1]} : vector<8x32xi32> to vector<8x1xi32>
    %7 = vector.broadcast %6 : vector<8x1xi32> to vector<8x128xi32>
    %8 = arith.cmpi eq, %1, %7 : vector<8x128xi32>
    %9 = arith.extui %8 : vector<8x128xi1> to vector<8x128xi32>
    %10 = arith.sitofp %9 : vector<8x128xi32> to vector<8x128xf32>
    %11 = arith.addf %2, %10 : vector<8x128xf32>
    %12 = vector.extract_strided_slice %0 {offsets = [0, 1], sizes = [8, 1], strides = [1, 1]} : vector<8x32xi32> to vector<8x1xi32>
    %13 = vector.broadcast %12 : vector<8x1xi32> to vector<8x128xi32>
    %14 = arith.cmpi eq, %1, %13 : vector<8x128xi32>
    %15 = arith.extui %14 : vector<8x128xi1> to vector<8x128xi32>
    %16 = arith.sitofp %15 : vector<8x128xi32> to vector<8x128xf32>
    %17 = arith.addf %3, %16 : vector<8x128xf32>
    %18 = vector.extract_strided_slice %0 {offsets = [0, 2], sizes = [8, 1], strides = [1, 1]} : vector<8x32xi32> to vector<8x1xi32>
    %19 = vector.broadcast %18 : vector<8x1xi32> to vector<8x128xi32>
    %20 = arith.cmpi eq, %1, %19 : vector<8x128xi32>
    %21 = arith.extui %20 : vector<8x128xi1> to vector<8x128xi32>
    %22 = arith.sitofp %21 : vector<8x128xi32> to vector<8x128xf32>
    %23 = arith.addf %4, %22 : vector<8x128xf32>
    %24 = vector.extract_strided_slice %0 {offsets = [0, 3], sizes = [8, 1], strides = [1, 1]} : vector<8x32xi32> to vector<8x1xi32>
    %25 = vector.broadcast %24 : vector<8x1xi32> to vector<8x128xi32>
    %26 = arith.cmpi eq, %1, %25 : vector<8x128xi32>
    %27 = arith.extui %26 : vector<8x128xi1> to vector<8x128xi32>
    %28 = arith.sitofp %27 : vector<8x128xi32> to vector<8x128xf32>
    %29 = arith.addf %5, %28 : vector<8x128xf32>
    %30 = vector.extract_strided_slice %0 {offsets = [0, 4], sizes = [8, 1], strides = [1, 1]} : vector<8x32xi32> to vector<8x1xi32>
    %31 = vector.broadcast %30 : vector<8x1xi32> to vector<8x128xi32>
    %32 = arith.cmpi eq, %1, %31 : vector<8x128xi32>
    %33 = arith.extui %32 : vector<8x128xi1> to vector<8x128xi32>
    %34 = arith.sitofp %33 : vector<8x128xi32> to vector<8x128xf32>
    %35 = arith.addf %11, %34 : vector<8x128xf32>
    %36 = vector.extract_strided_slice %0 {offsets = [0, 5], sizes = [8, 1], strides = [1, 1]} : vector<8x32xi32> to vector<8x1xi32>
    %37 = vector.broadcast %36 : vector<8x1xi32> to vector<8x128xi32>
    %38 = arith.cmpi eq, %1, %37 : vector<8x128xi32>
    %39 = arith.extui %38 : vector<8x128xi1> to vector<8x128xi32>
    %40 = arith.sitofp %39 : vector<8x128xi32> to vector<8x128xf32>
    %41 = arith.addf %17, %40 : vector<8x128xf32>
    %42 = vector.extract_strided_slice %0 {offsets = [0, 6], sizes = [8, 1], strides = [1, 1]} : vector<8x32xi32> to vector<8x1xi32>
    %43 = vector.broadcast %42 : vector<8x1xi32> to vector<8x128xi32>
    %44 = arith.cmpi eq, %1, %43 : vector<8x128xi32>
    %45 = arith.extui %44 : vector<8x128xi1> to vector<8x128xi32>
    %46 = arith.sitofp %45 : vector<8x128xi32> to vector<8x128xf32>
    %47 = arith.addf %23, %46 : vector<8x128xf32>
    %48 = vector.extract_strided_slice %0 {offsets = [0, 7], sizes = [8, 1], strides = [1, 1]} : vector<8x32xi32> to vector<8x1xi32>
    %49 = vector.broadcast %48 : vector<8x1xi32> to vector<8x128xi32>
    %50 = arith.cmpi eq, %1, %49 : vector<8x128xi32>
    %51 = arith.extui %50 : vector<8x128xi1> to vector<8x128xi32>
    %52 = arith.sitofp %51 : vector<8x128xi32> to vector<8x128xf32>
    %53 = arith.addf %29, %52 : vector<8x128xf32>
    %54 = vector.extract_strided_slice %0 {offsets = [0, 8], sizes = [8, 1], strides = [1, 1]} : vector<8x32xi32> to vector<8x1xi32>
    %55 = vector.broadcast %54 : vector<8x1xi32> to vector<8x128xi32>
    %56 = arith.cmpi eq, %1, %55 : vector<8x128xi32>
    %57 = arith.extui %56 : vector<8x128xi1> to vector<8x128xi32>
    %58 = arith.sitofp %57 : vector<8x128xi32> to vector<8x128xf32>
    %59 = arith.addf %35, %58 : vector<8x128xf32>
    %60 = vector.extract_strided_slice %0 {offsets = [0, 9], sizes = [8, 1], strides = [1, 1]} : vector<8x32xi32> to vector<8x1xi32>
    %61 = vector.broadcast %60 : vector<8x1xi32> to vector<8x128xi32>
    %62 = arith.cmpi eq, %1, %61 : vector<8x128xi32>
    %63 = arith.extui %62 : vector<8x128xi1> to vector<8x128xi32>
    %64 = arith.sitofp %63 : vector<8x128xi32> to vector<8x128xf32>
    %65 = arith.addf %41, %64 : vector<8x128xf32>
    %66 = vector.extract_strided_slice %0 {offsets = [0, 10], sizes = [8, 1], strides = [1, 1]} : vector<8x32xi32> to vector<8x1xi32>
    %67 = vector.broadcast %66 : vector<8x1xi32> to vector<8x128xi32>
    %68 = arith.cmpi eq, %1, %67 : vector<8x128xi32>
    %69 = arith.extui %68 : vector<8x128xi1> to vector<8x128xi32>
    %70 = arith.sitofp %69 : vector<8x128xi32> to vector<8x128xf32>
    %71 = arith.addf %47, %70 : vector<8x128xf32>
    %72 = vector.extract_strided_slice %0 {offsets = [0, 11], sizes = [8, 1], strides = [1, 1]} : vector<8x32xi32> to vector<8x1xi32>
    %73 = vector.broadcast %72 : vector<8x1xi32> to vector<8x128xi32>
    %74 = arith.cmpi eq, %1, %73 : vector<8x128xi32>
    %75 = arith.extui %74 : vector<8x128xi1> to vector<8x128xi32>
    %76 = arith.sitofp %75 : vector<8x128xi32> to vector<8x128xf32>
    %77 = arith.addf %53, %76 : vector<8x128xf32>
    %78 = vector.extract_strided_slice %0 {offsets = [0, 12], sizes = [8, 1], strides = [1, 1]} : vector<8x32xi32> to vector<8x1xi32>
    %79 = vector.broadcast %78 : vector<8x1xi32> to vector<8x128xi32>
    %80 = arith.cmpi eq, %1, %79 : vector<8x128xi32>
    %81 = arith.extui %80 : vector<8x128xi1> to vector<8x128xi32>
    %82 = arith.sitofp %81 : vector<8x128xi32> to vector<8x128xf32>
    %83 = arith.addf %59, %82 : vector<8x128xf32>
    %84 = vector.extract_strided_slice %0 {offsets = [0, 13], sizes = [8, 1], strides = [1, 1]} : vector<8x32xi32> to vector<8x1xi32>
    %85 = vector.broadcast %84 : vector<8x1xi32> to vector<8x128xi32>
    %86 = arith.cmpi eq, %1, %85 : vector<8x128xi32>
    %87 = arith.extui %86 : vector<8x128xi1> to vector<8x128xi32>
    %88 = arith.sitofp %87 : vector<8x128xi32> to vector<8x128xf32>
    %89 = arith.addf %65, %88 : vector<8x128xf32>
    %90 = vector.extract_strided_slice %0 {offsets = [0, 14], sizes = [8, 1], strides = [1, 1]} : vector<8x32xi32> to vector<8x1xi32>
    %91 = vector.broadcast %90 : vector<8x1xi32> to vector<8x128xi32>
    %92 = arith.cmpi eq, %1, %91 : vector<8x128xi32>
    %93 = arith.extui %92 : vector<8x128xi1> to vector<8x128xi32>
    %94 = arith.sitofp %93 : vector<8x128xi32> to vector<8x128xf32>
    %95 = arith.addf %71, %94 : vector<8x128xf32>
    %96 = vector.extract_strided_slice %0 {offsets = [0, 15], sizes = [8, 1], strides = [1, 1]} : vector<8x32xi32> to vector<8x1xi32>
    %97 = vector.broadcast %96 : vector<8x1xi32> to vector<8x128xi32>
    %98 = arith.cmpi eq, %1, %97 : vector<8x128xi32>
    %99 = arith.extui %98 : vector<8x128xi1> to vector<8x128xi32>
    %100 = arith.sitofp %99 : vector<8x128xi32> to vector<8x128xf32>
    %101 = arith.addf %77, %100 : vector<8x128xf32>
    %102 = vector.extract_strided_slice %0 {offsets = [0, 16], sizes = [8, 1], strides = [1, 1]} : vector<8x32xi32> to vector<8x1xi32>
    %103 = vector.broadcast %102 : vector<8x1xi32> to vector<8x128xi32>
    %104 = arith.cmpi eq, %1, %103 : vector<8x128xi32>
    %105 = arith.extui %104 : vector<8x128xi1> to vector<8x128xi32>
    %106 = arith.sitofp %105 : vector<8x128xi32> to vector<8x128xf32>
    %107 = arith.addf %83, %106 : vector<8x128xf32>
    %108 = vector.extract_strided_slice %0 {offsets = [0, 17], sizes = [8, 1], strides = [1, 1]} : vector<8x32xi32> to vector<8x1xi32>
    %109 = vector.broadcast %108 : vector<8x1xi32> to vector<8x128xi32>
    %110 = arith.cmpi eq, %1, %109 : vector<8x128xi32>
    %111 = arith.extui %110 : vector<8x128xi1> to vector<8x128xi32>
    %112 = arith.sitofp %111 : vector<8x128xi32> to vector<8x128xf32>
    %113 = arith.addf %89, %112 : vector<8x128xf32>
    %114 = vector.extract_strided_slice %0 {offsets = [0, 18], sizes = [8, 1], strides = [1, 1]} : vector<8x32xi32> to vector<8x1xi32>
    %115 = vector.broadcast %114 : vector<8x1xi32> to vector<8x128xi32>
    %116 = arith.cmpi eq, %1, %115 : vector<8x128xi32>
    %117 = arith.extui %116 : vector<8x128xi1> to vector<8x128xi32>
    %118 = arith.sitofp %117 : vector<8x128xi32> to vector<8x128xf32>
    %119 = arith.addf %95, %118 : vector<8x128xf32>
    %120 = vector.extract_strided_slice %0 {offsets = [0, 19], sizes = [8, 1], strides = [1, 1]} : vector<8x32xi32> to vector<8x1xi32>
    %121 = vector.broadcast %120 : vector<8x1xi32> to vector<8x128xi32>
    %122 = arith.cmpi eq, %1, %121 : vector<8x128xi32>
    %123 = arith.extui %122 : vector<8x128xi1> to vector<8x128xi32>
    %124 = arith.sitofp %123 : vector<8x128xi32> to vector<8x128xf32>
    %125 = arith.addf %101, %124 : vector<8x128xf32>
    %126 = vector.extract_strided_slice %0 {offsets = [0, 20], sizes = [8, 1], strides = [1, 1]} : vector<8x32xi32> to vector<8x1xi32>
    %127 = vector.broadcast %126 : vector<8x1xi32> to vector<8x128xi32>
    %128 = arith.cmpi eq, %1, %127 : vector<8x128xi32>
    %129 = arith.extui %128 : vector<8x128xi1> to vector<8x128xi32>
    %130 = arith.sitofp %129 : vector<8x128xi32> to vector<8x128xf32>
    %131 = arith.addf %107, %130 : vector<8x128xf32>
    %132 = vector.extract_strided_slice %0 {offsets = [0, 21], sizes = [8, 1], strides = [1, 1]} : vector<8x32xi32> to vector<8x1xi32>
    %133 = vector.broadcast %132 : vector<8x1xi32> to vector<8x128xi32>
    %134 = arith.cmpi eq, %1, %133 : vector<8x128xi32>
    %135 = arith.extui %134 : vector<8x128xi1> to vector<8x128xi32>
    %136 = arith.sitofp %135 : vector<8x128xi32> to vector<8x128xf32>
    %137 = arith.addf %113, %136 : vector<8x128xf32>
    %138 = vector.extract_strided_slice %0 {offsets = [0, 22], sizes = [8, 1], strides = [1, 1]} : vector<8x32xi32> to vector<8x1xi32>
    %139 = vector.broadcast %138 : vector<8x1xi32> to vector<8x128xi32>
    %140 = arith.cmpi eq, %1, %139 : vector<8x128xi32>
    %141 = arith.extui %140 : vector<8x128xi1> to vector<8x128xi32>
    %142 = arith.sitofp %141 : vector<8x128xi32> to vector<8x128xf32>
    %143 = arith.addf %119, %142 : vector<8x128xf32>
    %144 = vector.extract_strided_slice %0 {offsets = [0, 23], sizes = [8, 1], strides = [1, 1]} : vector<8x32xi32> to vector<8x1xi32>
    %145 = vector.broadcast %144 : vector<8x1xi32> to vector<8x128xi32>
    %146 = arith.cmpi eq, %1, %145 : vector<8x128xi32>
    %147 = arith.extui %146 : vector<8x128xi1> to vector<8x128xi32>
    %148 = arith.sitofp %147 : vector<8x128xi32> to vector<8x128xf32>
    %149 = arith.addf %125, %148 : vector<8x128xf32>
    %150 = vector.extract_strided_slice %0 {offsets = [0, 24], sizes = [8, 1], strides = [1, 1]} : vector<8x32xi32> to vector<8x1xi32>
    %151 = vector.broadcast %150 : vector<8x1xi32> to vector<8x128xi32>
    %152 = arith.cmpi eq, %1, %151 : vector<8x128xi32>
    %153 = arith.extui %152 : vector<8x128xi1> to vector<8x128xi32>
    %154 = arith.sitofp %153 : vector<8x128xi32> to vector<8x128xf32>
    %155 = arith.addf %131, %154 : vector<8x128xf32>
    %156 = vector.extract_strided_slice %0 {offsets = [0, 25], sizes = [8, 1], strides = [1, 1]} : vector<8x32xi32> to vector<8x1xi32>
    %157 = vector.broadcast %156 : vector<8x1xi32> to vector<8x128xi32>
    %158 = arith.cmpi eq, %1, %157 : vector<8x128xi32>
    %159 = arith.extui %158 : vector<8x128xi1> to vector<8x128xi32>
    %160 = arith.sitofp %159 : vector<8x128xi32> to vector<8x128xf32>
    %161 = arith.addf %137, %160 : vector<8x128xf32>
    %162 = vector.extract_strided_slice %0 {offsets = [0, 26], sizes = [8, 1], strides = [1, 1]} : vector<8x32xi32> to vector<8x1xi32>
    %163 = vector.broadcast %162 : vector<8x1xi32> to vector<8x128xi32>
    %164 = arith.cmpi eq, %1, %163 : vector<8x128xi32>
    %165 = arith.extui %164 : vector<8x128xi1> to vector<8x128xi32>
    %166 = arith.sitofp %165 : vector<8x128xi32> to vector<8x128xf32>
    %167 = arith.addf %143, %166 : vector<8x128xf32>
    %168 = vector.extract_strided_slice %0 {offsets = [0, 27], sizes = [8, 1], strides = [1, 1]} : vector<8x32xi32> to vector<8x1xi32>
    %169 = vector.broadcast %168 : vector<8x1xi32> to vector<8x128xi32>
    %170 = arith.cmpi eq, %1, %169 : vector<8x128xi32>
    %171 = arith.extui %170 : vector<8x128xi1> to vector<8x128xi32>
    %172 = arith.sitofp %171 : vector<8x128xi32> to vector<8x128xf32>
    %173 = arith.addf %149, %172 : vector<8x128xf32>
    %174 = vector.extract_strided_slice %0 {offsets = [0, 28], sizes = [8, 1], strides = [1, 1]} : vector<8x32xi32> to vector<8x1xi32>
    %175 = vector.broadcast %174 : vector<8x1xi32> to vector<8x128xi32>
    %176 = arith.cmpi eq, %1, %175 : vector<8x128xi32>
    %177 = arith.extui %176 : vector<8x128xi1> to vector<8x128xi32>
    %178 = arith.sitofp %177 : vector<8x128xi32> to vector<8x128xf32>
    %179 = arith.addf %155, %178 : vector<8x128xf32>
    %180 = vector.extract_strided_slice %0 {offsets = [0, 29], sizes = [8, 1], strides = [1, 1]} : vector<8x32xi32> to vector<8x1xi32>
    %181 = vector.broadcast %180 : vector<8x1xi32> to vector<8x128xi32>
    %182 = arith.cmpi eq, %1, %181 : vector<8x128xi32>
    %183 = arith.extui %182 : vector<8x128xi1> to vector<8x128xi32>
    %184 = arith.sitofp %183 : vector<8x128xi32> to vector<8x128xf32>
    %185 = arith.addf %161, %184 : vector<8x128xf32>
    %186 = vector.extract_strided_slice %0 {offsets = [0, 30], sizes = [8, 1], strides = [1, 1]} : vector<8x32xi32> to vector<8x1xi32>
    %187 = vector.broadcast %186 : vector<8x1xi32> to vector<8x128xi32>
    %188 = arith.cmpi eq, %1, %187 : vector<8x128xi32>
    %189 = arith.extui %188 : vector<8x128xi1> to vector<8x128xi32>
    %190 = arith.sitofp %189 : vector<8x128xi32> to vector<8x128xf32>
    %191 = arith.addf %167, %190 : vector<8x128xf32>
    %192 = vector.extract_strided_slice %0 {offsets = [0, 31], sizes = [8, 1], strides = [1, 1]} : vector<8x32xi32> to vector<8x1xi32>
    %193 = vector.broadcast %192 : vector<8x1xi32> to vector<8x128xi32>
    %194 = arith.cmpi eq, %1, %193 : vector<8x128xi32>
    %195 = arith.extui %194 : vector<8x128xi1> to vector<8x128xi32>
    %196 = arith.sitofp %195 : vector<8x128xi32> to vector<8x128xf32>
    %197 = arith.addf %173, %196 : vector<8x128xf32>
    %198 = arith.addf %179, %185 : vector<8x128xf32>
    %199 = arith.addf %191, %197 : vector<8x128xf32>
    %200 = arith.addf %198, %199 : vector<8x128xf32>
    %201 = arith.truncf %200 : vector<8x128xf32> to vector<8x128xbf16>
    %c0_4 = arith.constant 0 : index
    %c0_5 = arith.constant 0 : index
    %202 = vector.load %arg2[%c0_4, %c0_5] : memref<128x64xbf16, #tpu.memory_space<vmem>>, vector<128x64xbf16>
    %cst_6 = arith.constant dense<0.000000e+00> : vector<8x64xf32>
    %203 = tpu.matmul %201, %202, %cst_6 {dimension_numbers = #tpu.dot_dimension_numbers<[1], [0], [0], [1], [0, 0, 1, 1], [], []>} : vector<8x128xbf16>, vector<128x64xbf16>, vector<8x64xf32> -> vector<8x64xf32>
    %204 = arith.truncf %203 : vector<8x64xf32> to vector<8x64xbf16>
    %c0_7 = arith.constant 0 : index
    %c0_8 = arith.constant 0 : index
    %205 = vector.load %arg3[%c0_7, %c0_8] : memref<64x32xbf16, #tpu.memory_space<vmem>>, vector<64x32xbf16>
    %cst_9 = arith.constant dense<0.000000e+00> : vector<8x32xf32>
    %206 = tpu.matmul %204, %205, %cst_9 {dimension_numbers = #tpu.dot_dimension_numbers<[1], [0], [0], [1], [0, 0, 1, 1], [], []>} : vector<8x64xbf16>, vector<64x32xbf16>, vector<8x32xf32> -> vector<8x32xf32>
    %c0_10 = arith.constant 0 : index
    %c0_11 = arith.constant 0 : index
    %207 = vector.load %arg6[%c0_10, %c0_11] : memref<3x256xf32, #tpu.memory_space<vmem>>, vector<1x32xf32>
    %208 = vector.broadcast %207 : vector<1x32xf32> to vector<8x32xf32>
    %209 = arith.addf %206, %208 : vector<8x32xf32>
    %210 = arith.truncf %209 : vector<8x32xf32> to vector<8x32xbf16>
    %c0_12 = arith.constant 0 : index
    %c0_13 = arith.constant 0 : index
    %211 = vector.load %arg4[%c0_12, %c0_13] : memref<32x256xbf16, #tpu.memory_space<vmem>>, vector<32x256xbf16>
    %cst_14 = arith.constant dense<0.000000e+00> : vector<8x256xf32>
    %212 = tpu.matmul %210, %211, %cst_14 {dimension_numbers = #tpu.dot_dimension_numbers<[1], [0], [0], [1], [0, 0, 1, 1], [], []>} : vector<8x32xbf16>, vector<32x256xbf16>, vector<8x256xf32> -> vector<8x256xf32>
    %c1 = arith.constant 1 : index
    %c0_15 = arith.constant 0 : index
    %213 = vector.load %arg6[%c1, %c0_15] : memref<3x256xf32, #tpu.memory_space<vmem>>, vector<1x256xf32>
    %214 = vector.broadcast %213 : vector<1x256xf32> to vector<8x256xf32>
    %215 = arith.addf %212, %214 : vector<8x256xf32>
    %cst_16 = arith.constant 0.000000e+00 : f32
    %216 = vector.broadcast %cst_16 : f32 to vector<8x256xf32>
    %217 = arith.maximumf %215, %216 : vector<8x256xf32>
    %218 = arith.truncf %217 : vector<8x256xf32> to vector<8x256xbf16>
    %219 = vector.extract_strided_slice %218 {offsets = [0, 0], sizes = [8, 128], strides = [1, 1]} : vector<8x256xbf16> to vector<8x128xbf16>
    %c0_17 = arith.constant 0 : index
    %c0_18 = arith.constant 0 : index
    %c0_19 = arith.constant 0 : index
    %220 = vector.load %arg5[%c0_17, %c0_18, %c0_19] : memref<2x128x128xbf16, #tpu.memory_space<vmem>>, vector<1x128x128xbf16>
    %221 = vector.shape_cast %220 : vector<1x128x128xbf16> to vector<128x128xbf16>
    %cst_20 = arith.constant dense<0.000000e+00> : vector<8x128xf32>
    %222 = tpu.matmul %219, %221, %cst_20 {dimension_numbers = #tpu.dot_dimension_numbers<[1], [0], [0], [1], [0, 0, 1, 1], [], []>} : vector<8x128xbf16>, vector<128x128xbf16>, vector<8x128xf32> -> vector<8x128xf32>
    %c2 = arith.constant 2 : index
    %c0_21 = arith.constant 0 : index
    %223 = vector.load %arg6[%c2, %c0_21] : memref<3x256xf32, #tpu.memory_space<vmem>>, vector<1x128xf32>
    %224 = vector.broadcast %223 : vector<1x128xf32> to vector<8x128xf32>
    %225 = arith.addf %222, %224 : vector<8x128xf32>
    %c0_22 = arith.constant 0 : index
    %c0_23 = arith.constant 0 : index
    %226 = vector.load %arg7[%c0_22, %c0_23] : memref<8x256xf32, #tpu.memory_space<vmem>>, vector<8x128xf32>
    tpu.vector_store %arg7[%c0_22, %c0_23], %225 {strides = array<i32>} : memref<8x256xf32, #tpu.memory_space<vmem>>, vector<8x128xf32>,
    %227 = vector.extract_strided_slice %218 {offsets = [0, 128], sizes = [8, 128], strides = [1, 1]} : vector<8x256xbf16> to vector<8x128xbf16>
    %c1_24 = arith.constant 1 : index
    %c0_25 = arith.constant 0 : index
    %c0_26 = arith.constant 0 : index
    %228 = vector.load %arg5[%c1_24, %c0_25, %c0_26] : memref<2x128x128xbf16, #tpu.memory_space<vmem>>, vector<1x128x128xbf16>
    %229 = vector.shape_cast %228 : vector<1x128x128xbf16> to vector<128x128xbf16>
    %cst_27 = arith.constant dense<0.000000e+00> : vector<8x128xf32>
    %230 = tpu.matmul %227, %229, %cst_27 {dimension_numbers = #tpu.dot_dimension_numbers<[1], [0], [0], [1], [0, 0, 1, 1], [], []>} : vector<8x128xbf16>, vector<128x128xbf16>, vector<8x128xf32> -> vector<8x128xf32>
    %c2_28 = arith.constant 2 : index
    %c128 = arith.constant 128 : index
    %231 = vector.load %arg6[%c2_28, %c128] : memref<3x256xf32, #tpu.memory_space<vmem>>, vector<1x128xf32>
    %232 = vector.broadcast %231 : vector<1x128xf32> to vector<8x128xf32>
    %233 = arith.addf %230, %232 : vector<8x128xf32>
    %c0_29 = arith.constant 0 : index
    %c128_30 = arith.constant 128 : index
    %234 = vector.load %arg7[%c0_29, %c128_30] : memref<8x256xf32, #tpu.memory_space<vmem>>, vector<8x128xf32>
    tpu.vector_store %arg7[%c0_29, %c128_30], %233 {strides = array<i32>} : memref<8x256xf32, #tpu.memory_space<vmem>>, vector<8x128xf32>,
    return
  }
  func.func @transform_0(%arg0: i32) -> (i32, i32) {
    %c0_i32 = arith.constant 0 : i32
    %c0_i32_0 = arith.constant 0 : i32
    return %arg0, %c0_i32 : i32, i32
  }
  func.func @transform_1(%arg0: i32) -> (i32, i32) {
    %c0_i32 = arith.constant 0 : i32
    %c0_i32_0 = arith.constant 0 : i32
    %c0_i32_1 = arith.constant 0 : i32
    return %c0_i32, %c0_i32_0 : i32, i32
  }
  func.func @transform_2(%arg0: i32) -> (i32, i32) {
    %c0_i32 = arith.constant 0 : i32
    %c0_i32_0 = arith.constant 0 : i32
    %c0_i32_1 = arith.constant 0 : i32
    return %c0_i32, %c0_i32_0 : i32, i32
  }
  func.func @transform_3(%arg0: i32) -> (i32, i32) {
    %c0_i32 = arith.constant 0 : i32
    %c0_i32_0 = arith.constant 0 : i32
    %c0_i32_1 = arith.constant 0 : i32
    return %c0_i32, %c0_i32_0 : i32, i32
  }
  func.func @transform_4(%arg0: i32) -> (i32, i32, i32) {
    %c0_i32 = arith.constant 0 : i32
    %c0_i32_0 = arith.constant 0 : i32
    %c0_i32_1 = arith.constant 0 : i32
    %c0_i32_2 = arith.constant 0 : i32
    return %c0_i32, %c0_i32_0, %c0_i32_1 : i32, i32, i32
  }
  func.func @transform_5(%arg0: i32) -> (i32, i32) {
    %c0_i32 = arith.constant 0 : i32
    %c0_i32_0 = arith.constant 0 : i32
    %c0_i32_1 = arith.constant 0 : i32
    return %c0_i32, %c0_i32_0 : i32, i32
  }
  func.func @transform_6(%arg0: i32) -> (i32, i32) {
    %c0_i32 = arith.constant 0 : i32
    %c0_i32_0 = arith.constant 0 : i32
    return %arg0, %c0_i32 : i32, i32
  }
}

</mosaic_0001>

<llo_original>
// kernel: dualnn_forward.1
$region0: #{dualnn_forward.1}
  #allocation0 [shape = 'u32[]', space=smem, size = 0x4, offset = 0x4, fixed_abs, tag = 'smem constant byte address 0x4 - core index']
  #allocation1 [shape = 'u32[144,128]{1,0:T(1,128)}', space=vmem, size = 0x12000, scoped, tag = 'internal scratch']
  %s0 = inlined_call_operand.vmem [shape: s32[16,32], index: 0, kind: input, shape index: {}]
  %s1 = inlined_call_operand.vmem [shape: bf16[128,64], index: 1, kind: input, shape index: {}]
  %s2 = inlined_call_operand.vmem [shape: bf16[64,32], index: 2, kind: input, shape index: {}]
  %s3 = inlined_call_operand.hbm [shape: bf16[32,256], index: 3, kind: input, shape index: {}]
  %s4 = inlined_call_operand.vmem [shape: bf16[2,128,128], index: 4, kind: input, shape index: {}]
  %s5 = inlined_call_operand.hbm [shape: f32[3,256], index: 5, kind: input, shape index: {}]
  %s6 = inlined_call_operand.vmem [shape: f32[16,256], index: 6, kind: output, shape index: {}]
  %s7 = sld [smem:[#allocation0]]
  $region65: #{dualnn_forward.1} parent=0
    _
  %s9 = ssub.s32 1, %s7
  %s10 = scalar_select 0, %s9, %s7
  $region1: #{dualnn_forward.1} parent=0
    #allocation2 [shape = 'u8[16384]{0}', space=vmem, size = 0x4000, scoped, tag = 'input window, operand 3, single buffered']
    #allocation3 [shape = 's32[2]{0}', space=sflag, size = 0x8, scoped, tag = 'scoped memory for dualnn_forward.1']
    #allocation4 [shape = 'u8[4096]{0}', space=vmem, size = 0x1000, scoped, tag = 'input window, operand 5, single buffered']
    #allocation5 [shape = 's32[1]{0}', space=sflag, size = 0x4, scoped, tag = 'scoped memory for dualnn_forward.1']
    %11 = vsyncpa [#allocation3], 0
    %12 = vsyncpa [#allocation5], 0
    loop: start=0, step=1, limit=4
    $region2: #{dualnn_forward.1} parent=1 // loop_pre_header
      _
    $region3: #{dualnn_forward.1} parent=1 // loop_header
      %s14 = sphi 0, %s18
      %p15 = scmp.ge.s32.totalorder %s14, 4
      %s24 = sphi 0, %s26
      %s27 = sphi 0, %s24
      %s28 = sphi 0, %s27
      %s44 = sphi 0, %s28
      %s48 = sphi 0, %s48
      %s50 = sphi 0, %s48
      %s51 = sphi 0, %s50
      %s65 = sphi 0, %s51
      %s69 = sphi 0, %s69
      %s71 = sphi 0, %s69
      %s72 = sphi 0, %s71
      %s86 = sphi 0, %s72
      %s90 = sphi 0, %s90
      %s92 = sphi 0, %s90
      %s93 = sphi 0, %s92
      %s107 = sphi 0, %s93
      %s111 = sphi 0, %s111
      %s113 = sphi 0, %s111
      %s114 = sphi 0, %s113
      %s128 = sphi 0, %s114
      %s132 = sphi 0, %s132
      %s134 = sphi 0, %s132
      %s135 = sphi 0, %s134
      %s149 = sphi 0, %s135
      %s155 = sphi 0, %s157
      %s158 = sphi 0, %s155
      %s159 = sphi 0, %s158
      %s175 = sphi 0, %s159
    $region4: #{dualnn_forward.1} parent=1 // loop_header_branch
      %17 = sbr.rel (%p15) target = $region8
    $region5: #{dualnn_forward.1} parent=1 // loop_body
      %s19 = ssub.s32 %s14, 1
      %s20 = ssub.s32 %s14, 2
      %s21 = sadd.s32 %s14, 1
      %s22 = ssub.s32 %s14, %s21
      %p23 = scmp.eq.s32.totalorder %s22, 0
      %s25 = sadd.s32 %s24, 1
      %s26 = scalar_select %p23, %s24, %s25
      %p29 = pneg %p23
      %p30 = scmp.eq.s32.totalorder %s14, 1
      %p31 = por %p29, %p30
      %p32 = scmp.ne.s32.totalorder %s24, %s27
      %p33 = scmp.eq.s32.totalorder %s14, 0
      %p34 = por %p32, %p33
      %p35 = scmp.ne.s32.totalorder %s24, %s27
      %p36 = scmp.eq.s32.totalorder %s19, 1
      %p37 = por %p35, %p36
      %p38 = scmp.ne.s32.totalorder %s27, %s28
      %p39 = scmp.eq.s32.totalorder %s19, 0
      %p40 = por %p38, %p39
      %p41 = scmp.ne.s32.totalorder %s27, %s28
      %p42 = scmp.eq.s32.totalorder %s20, 1
      %p43 = por %p41, %p42
      %p45 = scmp.ne.s32.totalorder %s28, %s44
      %p46 = scmp.eq.s32.totalorder %s20, 0
      %p47 = por %p45, %p46
      %s49 = sadd.s32 %s48, 1
      %p52 = scmp.eq.s32.totalorder %s14, 1
      %p53 = scmp.ne.s32.totalorder %s48, %s50
      %p54 = scmp.eq.s32.totalorder %s14, 0
      %p55 = por %p53, %p54
      %p56 = scmp.ne.s32.totalorder %s48, %s50
      %p57 = scmp.eq.s32.totalorder %s19, 1
      %p58 = por %p56, %p57
      %p59 = scmp.ne.s32.totalorder %s50, %s51
      %p60 = scmp.eq.s32.totalorder %s19, 0
      %p61 = por %p59, %p60
      %p62 = scmp.ne.s32.totalorder %s50, %s51
      %p63 = scmp.eq.s32.totalorder %s20, 1
      %p64 = por %p62, %p63
      %p66 = scmp.ne.s32.totalorder %s51, %s65
      %p67 = scmp.eq.s32.totalorder %s20, 0
      %p68 = por %p66, %p67
      %s70 = sadd.s32 %s69, 1
      %p73 = scmp.eq.s32.totalorder %s14, 1
      %p74 = scmp.ne.s32.totalorder %s69, %s71
      %p75 = scmp.eq.s32.totalorder %s14, 0
      %p76 = por %p74, %p75
      %p77 = scmp.ne.s32.totalorder %s69, %s71
      %p78 = scmp.eq.s32.totalorder %s19, 1
      %p79 = por %p77, %p78
      %p80 = scmp.ne.s32.totalorder %s71, %s72
      %p81 = scmp.eq.s32.totalorder %s19, 0
      %p82 = por %p80, %p81
      %p83 = scmp.ne.s32.totalorder %s71, %s72
      %p84 = scmp.eq.s32.totalorder %s20, 1
      %p85 = por %p83, %p84
      %p87 = scmp.ne.s32.totalorder %s72, %s86
      %p88 = scmp.eq.s32.totalorder %s20, 0
      %p89 = por %p87, %p88
      %s91 = sadd.s32 %s90, 1
      %p94 = scmp.eq.s32.totalorder %s14, 1
      %p95 = scmp.ne.s32.totalorder %s90, %s92
      %p96 = scmp.eq.s32.totalorder %s14, 0
      %p97 = por %p95, %p96
      %p98 = scmp.ne.s32.totalorder %s90, %s92
      %p99 = scmp.eq.s32.totalorder %s19, 1
      %p100 = por %p98, %p99
      %p101 = scmp.ne.s32.totalorder %s92, %s93
      %p102 = scmp.eq.s32.totalorder %s19, 0
      %p103 = por %p101, %p102
      %p104 = scmp.ne.s32.totalorder %s92, %s93
      %p105 = scmp.eq.s32.totalorder %s20, 1
      %p106 = por %p104, %p105
      %p108 = scmp.ne.s32.totalorder %s93, %s107
      %p109 = scmp.eq.s32.totalorder %s20, 0
      %p110 = por %p108, %p109
      %s112 = sadd.s32 %s111, 1
      %p115 = scmp.eq.s32.totalorder %s14, 1
      %p116 = scmp.ne.s32.totalorder %s111, %s113
      %p117 = scmp.eq.s32.totalorder %s14, 0
      %p118 = por %p116, %p117
      %p119 = scmp.ne.s32.totalorder %s111, %s113
      %p120 = scmp.eq.s32.totalorder %s19, 1
      %p121 = por %p119, %p120
      %p122 = scmp.ne.s32.totalorder %s113, %s114
      %p123 = scmp.eq.s32.totalorder %s19, 0
      %p124 = por %p122, %p123
      %p125 = scmp.ne.s32.totalorder %s113, %s114
      %p126 = scmp.eq.s32.totalorder %s20, 1
      %p127 = por %p125, %p126
      %p129 = scmp.ne.s32.totalorder %s114, %s128
      %p130 = scmp.eq.s32.totalorder %s20, 0
      %p131 = por %p129, %p130
      %s133 = sadd.s32 %s132, 1
      %p136 = scmp.eq.s32.totalorder %s14, 1
      %p137 = scmp.ne.s32.totalorder %s132, %s134
      %p138 = scmp.eq.s32.totalorder %s14, 0
      %p139 = por %p137, %p138
      %p140 = scmp.ne.s32.totalorder %s132, %s134
      %p141 = scmp.eq.s32.totalorder %s19, 1
      %p142 = por %p140, %p141
      %p143 = scmp.ne.s32.totalorder %s134, %s135
      %p144 = scmp.eq.s32.totalorder %s19, 0
      %p145 = por %p143, %p144
      %p146 = scmp.ne.s32.totalorder %s134, %s135
      %p147 = scmp.eq.s32.totalorder %s20, 1
      %p148 = por %p146, %p147
      %p150 = scmp.ne.s32.totalorder %s135, %s149
      %p151 = scmp.eq.s32.totalorder %s20, 0
      %p152 = por %p150, %p151
      %s153 = ssub.s32 %s14, %s21
      %p154 = scmp.eq.s32.totalorder %s153, 0
      %s156 = sadd.s32 %s155, 1
      %s157 = scalar_select %p154, %s155, %s156
      %p160 = pneg %p154
      %p161 = scmp.eq.s32.totalorder %s14, 1
      %p162 = por %p160, %p161
      %p163 = scmp.ne.s32.totalorder %s155, %s158
      %p164 = scmp.eq.s32.totalorder %s14, 0
      %p165 = por %p163, %p164
      %p166 = scmp.ne.s32.totalorder %s155, %s158
      %p167 = scmp.eq.s32.totalorder %s19, 1
      %p168 = por %p166, %p167
      %p169 = scmp.ne.s32.totalorder %s158, %s159
      %p170 = scmp.eq.s32.totalorder %s19, 0
      %p171 = por %p169, %p170
      %p172 = scmp.ne.s32.totalorder %s158, %s159
      %p173 = scmp.eq.s32.totalorder %s20, 1
      %p174 = por %p172, %p173
      %p176 = scmp.ne.s32.totalorder %s159, %s175
      %p177 = scmp.eq.s32.totalorder %s20, 0
      %p178 = por %p176, %p177
      %p179 = scmp.le.s32.totalorder 1, %s14
      %p180 = scmp.lt.s32.totalorder %s14, 3
      %p181 = pnand %p179, %p180
      %p182 = pneg %p181
      // Predicated region
      $region9: #{dualnn_forward.1} parent=5 // pred_check
        _
      $region10: #{dualnn_forward.1} parent=5 // pred_check_branch
        %184 = sbr.rel (%p181) target = $region12
      $region11: #{dualnn_forward.1} parent=5 // pred_region
        %s185 = ssub.s32 %s14, 1
        // Predicated region
        $region13: #{dualnn_forward.1} parent=11 // pred_check
          %p186 = pneg %p61
        $region14: #{dualnn_forward.1} parent=11 // pred_check_branch
          %188 = sbr.rel (%p186) target = $region16
        $region15: #{dualnn_forward.1} parent=11 // pred_region
          _
        $region16: #{dualnn_forward.1} parent=11 // pred_fallthru
          _
        // Predicated region
        $region17: #{dualnn_forward.1} parent=11 // pred_check
          %p189 = pneg %p82
        $region18: #{dualnn_forward.1} parent=11 // pred_check_branch
          %191 = sbr.rel (%p189) target = $region20
        $region19: #{dualnn_forward.1} parent=11 // pred_region
          _
        $region20: #{dualnn_forward.1} parent=11 // pred_fallthru
          _
        // Predicated region
        $region21: #{dualnn_forward.1} parent=11 // pred_check
          %p192 = pneg %p103
        $region22: #{dualnn_forward.1} parent=11 // pred_check_branch
          %194 = sbr.rel (%p192) target = $region24
        $region23: #{dualnn_forward.1} parent=11 // pred_region
          %s196 = ssub.s32 512, 512
          %197 = vsyncadd [#allocation3], %s196
          %s198 = sshll.u32 [#allocation2], 4
          %s199 = int_to_ptr.vmem [resolvable:$true] %s198
          %204 = dma.hbm_to_vmem [thread:$0]  %s3, 512, %s199, [#allocation3], 128, 128, 8
        $region24: #{dualnn_forward.1} parent=11 // pred_fallthru
          _
        // Predicated region
        $region25: #{dualnn_forward.1} parent=11 // pred_check
          %p205 = pneg %p124
        $region26: #{dualnn_forward.1} parent=11 // pred_check_branch
          %207 = sbr.rel (%p205) target = $region28
        $region27: #{dualnn_forward.1} parent=11 // pred_region
          _
        $region28: #{dualnn_forward.1} parent=11 // pred_fallthru
          _
        // Predicated region
        $region29: #{dualnn_forward.1} parent=11 // pred_check
          %p208 = pneg %p145
        $region30: #{dualnn_forward.1} parent=11 // pred_check_branch
          %210 = sbr.rel (%p208) target = $region32
        $region31: #{dualnn_forward.1} parent=11 // pred_region
          %s212 = ssub.s32 128, 128
          %213 = vsyncadd [#allocation5], %s212
          %s215 = sshll.u32 [#allocation4], 4
          %s216 = int_to_ptr.vmem [resolvable:$true] %s215
          %218 = dma.hbm_to_vmem [thread:$0]  %s5, 128, %s216, [#allocation5]
        $region32: #{dualnn_forward.1} parent=11 // pred_fallthru
          _
      $region12: #{dualnn_forward.1} parent=5 // pred_fallthru
        _
      %p219 = scmp.lt.s32.totalorder %s14, 2
      // Predicated region
      $region33: #{dualnn_forward.1} parent=5 // pred_check
        %p220 = pneg %p219
      $region34: #{dualnn_forward.1} parent=5 // pred_check_branch
        %222 = sbr.rel (%p220) target = $region36
      $region35: #{dualnn_forward.1} parent=5 // pred_region
        // Predicated region
        $region37: #{dualnn_forward.1} parent=35 // pred_check
          %p223 = pneg %p34
        $region38: #{dualnn_forward.1} parent=35 // pred_check_branch
          %225 = sbr.rel (%p223) target = $region40
        $region39: #{dualnn_forward.1} parent=35 // pred_region
          %p226 = scmp.lt.s32.totalorder %s14, 1
          %s227 = scalar_select %p226, %s14, 1
          %s228 = smul.addr %s227, 8
          %s229 = scalar_lea.vmem %s0, %s228
        $region40: #{dualnn_forward.1} parent=35 // pred_fallthru
          _
      $region36: #{dualnn_forward.1} parent=5 // pred_fallthru
        _
      %p230 = scmp.le.s32.totalorder 1, %s14
      %p231 = scmp.lt.s32.totalorder %s14, 3
      %p232 = pnand %p230, %p231
      %p233 = pneg %p232
      // Predicated region
      $region41: #{dualnn_forward.1} parent=5 // pred_check
        _
      $region42: #{dualnn_forward.1} parent=5 // pred_check_branch
        %235 = sbr.rel (%p232) target = $region44
      $region43: #{dualnn_forward.1} parent=5 // pred_region
        %s236 = ssub.s32 %s14, 1
        // Predicated region
        $region45: #{dualnn_forward.1} parent=43 // pred_check
          %p237 = pneg %p103
        $region46: #{dualnn_forward.1} parent=43 // pred_check_branch
          %239 = sbr.rel (%p237) target = $region48
        $region47: #{dualnn_forward.1} parent=43 // pred_region
          %240 = dma.done [#allocation3], 512
        $region48: #{dualnn_forward.1} parent=43 // pred_fallthru
          _
        // Predicated region
        $region49: #{dualnn_forward.1} parent=43 // pred_check
          %p241 = pneg %p145
        $region50: #{dualnn_forward.1} parent=43 // pred_check_branch
          %243 = sbr.rel (%p241) target = $region52
        $region51: #{dualnn_forward.1} parent=43 // pred_region
          %244 = dma.done [#allocation5], 128
        $region52: #{dualnn_forward.1} parent=43 // pred_fallthru
          _
        %p245 = scmp.lt.s32.totalorder %s19, 1
        %s246 = scalar_select %p245, %s19, 1
        %s247 = smul.addr %s246, 8
        %s248 = scalar_lea.vmem %s0, %s247
        %p249 = pneg %p40
        %p250 = pneg %p37
        %p251 = pneg %p61
        %p252 = pneg %p58
        %p253 = pneg %p82
        %p254 = pneg %p79
        %p255 = pneg %p103
        %p256 = pneg %p100
        %p257 = pneg %p124
        %p258 = pneg %p121
        %p259 = pneg %p145
        %p260 = pneg %p142
        %p261 = pneg %p171
        %p262 = pneg %p168
        %p263 = scmp.lt.s32.totalorder %s19, 1
        %s264 = scalar_select %p263, %s19, 1
        %s265 = smul.addr %s264, 2
        %s266 = smul.addr %s265, 8
        %s267 = scalar_lea.vmem %s6, %s266
        %p268 = scmp.lt.s32.totalorder %s19, 1
        %s269 = scalar_select %p268, %s19, 1
        %s270 = smul.addr %s269, 8
        %s271 = scalar_lea.vmem %s0, %s270
        %p272 = scmp.lt.s32.totalorder %s19, 1
        %s273 = scalar_select %p272, %s19, 1
        %s274 = smul.addr %s273, 2
        %s275 = smul.addr %s274, 8
        %s276 = scalar_lea.vmem %s6, %s275
        %v278 = vld [vmem:[%s271] sm:$0xff]
        %v279 = vlaneseq
        %v280 = vand.u32 %v279, 127
        %281 = vset.pattern.permute.xlu0 0
        %282 = vperm.xlu0 %281, %v278
        %v283 = vpop.permute.xlu0 %282
        %vm284 = vcmp.eq.s32.totalorder %v280, %v283
        %v285 = vsel %vm284, 1, 0
        %v286 = vcvt.s32.f32 %v285
        %v287 = vadd.f32 %v286, 0.0
        %288 = vset.pattern.permute.xlu0 1
        %289 = vperm.xlu0 %288, %v278
        %v290 = vpop.permute.xlu0 %289
        %vm291 = vcmp.eq.s32.totalorder %v280, %v290
        %v292 = vsel %vm291, 1, 0
        %v293 = vcvt.s32.f32 %v292
        %v294 = vadd.f32 %v293, 0.0
        %295 = vset.pattern.permute.xlu0 2
        %296 = vperm.xlu0 %295, %v278
        %v297 = vpop.permute.xlu0 %296
        %vm298 = vcmp.eq.s32.totalorder %v280, %v297
        %v299 = vsel %vm298, 1, 0
        %v300 = vcvt.s32.f32 %v299
        %v301 = vadd.f32 %v300, 0.0
        %302 = vset.pattern.permute.xlu0 3
        %303 = vperm.xlu0 %302, %v278
        %v304 = vpop.permute.xlu0 %303
        %vm305 = vcmp.eq.s32.totalorder %v280, %v304
        %v306 = vsel %vm305, 1, 0
        %v307 = vcvt.s32.f32 %v306
        %v308 = vadd.f32 %v307, 0.0
        %309 = vset.pattern.permute.xlu0 4
        %310 = vperm.xlu0 %309, %v278
        %v311 = vpop.permute.xlu0 %310
        %vm312 = vcmp.eq.s32.totalorder %v280, %v311
        %v313 = vsel %vm312, 1, 0
        %v314 = vcvt.s32.f32 %v313
        %v315 = vadd.f32 %v287, %v314
        %316 = vset.pattern.permute.xlu0 5
        %317 = vperm.xlu0 %316, %v278
        %v318 = vpop.permute.xlu0 %317
        %vm319 = vcmp.eq.s32.totalorder %v280, %v318
        %v320 = vsel %vm319, 1, 0
        %v321 = vcvt.s32.f32 %v320
        %v322 = vadd.f32 %v294, %v321
        %323 = vset.pattern.permute.xlu0 6
        %324 = vperm.xlu0 %323, %v278
        %v325 = vpop.permute.xlu0 %324
        %vm326 = vcmp.eq.s32.totalorder %v280, %v325
        %v327 = vsel %vm326, 1, 0
        %v328 = vcvt.s32.f32 %v327
        %v329 = vadd.f32 %v301, %v328
        %330 = vset.pattern.permute.xlu0 7
        %331 = vperm.xlu0 %330, %v278
        %v332 = vpop.permute.xlu0 %331
        %vm333 = vcmp.eq.s32.totalorder %v280, %v332
        %v334 = vsel %vm333, 1, 0
        %v335 = vcvt.s32.f32 %v334
        %v336 = vadd.f32 %v308, %v335
        %337 = vset.pattern.permute.xlu0 8
        %338 = vperm.xlu0 %337, %v278
        %v339 = vpop.permute.xlu0 %338
        %vm340 = vcmp.eq.s32.totalorder %v280, %v339
        %v341 = vsel %vm340, 1, 0
        %v342 = vcvt.s32.f32 %v341
        %v343 = vadd.f32 %v315, %v342
        %344 = vset.pattern.permute.xlu0 9
        %345 = vperm.xlu0 %344, %v278
        %v346 = vpop.permute.xlu0 %345
        %vm347 = vcmp.eq.s32.totalorder %v280, %v346
        %v348 = vsel %vm347, 1, 0
        %v349 = vcvt.s32.f32 %v348
        %v350 = vadd.f32 %v322, %v349
        %351 = vset.pattern.permute.xlu0 10
        %352 = vperm.xlu0 %351, %v278
        %v353 = vpop.permute.xlu0 %352
        %vm354 = vcmp.eq.s32.totalorder %v280, %v353
        %v355 = vsel %vm354, 1, 0
        %v356 = vcvt.s32.f32 %v355
        %v357 = vadd.f32 %v329, %v356
        %358 = vset.pattern.permute.xlu0 11
        %359 = vperm.xlu0 %358, %v278
        %v360 = vpop.permute.xlu0 %359
        %vm361 = vcmp.eq.s32.totalorder %v280, %v360
        %v362 = vsel %vm361, 1, 0
        %v363 = vcvt.s32.f32 %v362
        %v364 = vadd.f32 %v336, %v363
        %365 = vset.pattern.permute.xlu0 12
        %366 = vperm.xlu0 %365, %v278
        %v367 = vpop.permute.xlu0 %366
        %vm368 = vcmp.eq.s32.totalorder %v280, %v367
        %v369 = vsel %vm368, 1, 0
        %v370 = vcvt.s32.f32 %v369
        %v371 = vadd.f32 %v343, %v370
        %372 = vset.pattern.permute.xlu0 13
        %373 = vperm.xlu0 %372, %v278
        %v374 = vpop.permute.xlu0 %373
        %vm375 = vcmp.eq.s32.totalorder %v280, %v374
        %v376 = vsel %vm375, 1, 0
        %v377 = vcvt.s32.f32 %v376
        %v378 = vadd.f32 %v350, %v377
        %379 = vset.pattern.permute.xlu0 14
        %380 = vperm.xlu0 %379, %v278
        %v381 = vpop.permute.xlu0 %380
        %vm382 = vcmp.eq.s32.totalorder %v280, %v381
        %v383 = vsel %vm382, 1, 0
        %v384 = vcvt.s32.f32 %v383
        %v385 = vadd.f32 %v357, %v384
        %386 = vset.pattern.permute.xlu0 15
        %387 = vperm.xlu0 %386, %v278
        %v388 = vpop.permute.xlu0 %387
        %vm389 = vcmp.eq.s32.totalorder %v280, %v388
        %v390 = vsel %vm389, 1, 0
        %v391 = vcvt.s32.f32 %v390
        %v392 = vadd.f32 %v364, %v391
        %393 = vset.pattern.permute.xlu0 16
        %394 = vperm.xlu0 %393, %v278
        %v395 = vpop.permute.xlu0 %394
        %vm396 = vcmp.eq.s32.totalorder %v280, %v395
        %v397 = vsel %vm396, 1, 0
        %v398 = vcvt.s32.f32 %v397
        %v399 = vadd.f32 %v371, %v398
        %400 = vset.pattern.permute.xlu0 17
        %401 = vperm.xlu0 %400, %v278
        %v402 = vpop.permute.xlu0 %401
        %vm403 = vcmp.eq.s32.totalorder %v280, %v402
        %v404 = vsel %vm403, 1, 0
        %v405 = vcvt.s32.f32 %v404
        %v406 = vadd.f32 %v378, %v405
        %407 = vset.pattern.permute.xlu0 18
        %408 = vperm.xlu0 %407, %v278
        %v409 = vpop.permute.xlu0 %408
        %vm410 = vcmp.eq.s32.totalorder %v280, %v409
        %v411 = vsel %vm410, 1, 0
        %v412 = vcvt.s32.f32 %v411
        %v413 = vadd.f32 %v385, %v412
        %414 = vset.pattern.permute.xlu0 19
        %415 = vperm.xlu0 %414, %v278
        %v416 = vpop.permute.xlu0 %415
        %vm417 = vcmp.eq.s32.totalorder %v280, %v416
        %v418 = vsel %vm417, 1, 0
        %v419 = vcvt.s32.f32 %v418
        %v420 = vadd.f32 %v392, %v419
        %421 = vset.pattern.permute.xlu0 20
        %422 = vperm.xlu0 %421, %v278
        %v423 = vpop.permute.xlu0 %422
        %vm424 = vcmp.eq.s32.totalorder %v280, %v423
        %v425 = vsel %vm424, 1, 0
        %v426 = vcvt.s32.f32 %v425
        %v427 = vadd.f32 %v399, %v426
        %428 = vset.pattern.permute.xlu0 21
        %429 = vperm.xlu0 %428, %v278
        %v430 = vpop.permute.xlu0 %429
        %vm431 = vcmp.eq.s32.totalorder %v280, %v430
        %v432 = vsel %vm431, 1, 0
        %v433 = vcvt.s32.f32 %v432
        %v434 = vadd.f32 %v406, %v433
        %435 = vset.pattern.permute.xlu0 22
        %436 = vperm.xlu0 %435, %v278
        %v437 = vpop.permute.xlu0 %436
        %vm438 = vcmp.eq.s32.totalorder %v280, %v437
        %v439 = vsel %vm438, 1, 0
        %v440 = vcvt.s32.f32 %v439
        %v441 = vadd.f32 %v413, %v440
        %442 = vset.pattern.permute.xlu0 23
        %443 = vperm.xlu0 %442, %v278
        %v444 = vpop.permute.xlu0 %443
        %vm445 = vcmp.eq.s32.totalorder %v280, %v444
        %v446 = vsel %vm445, 1, 0
        %v447 = vcvt.s32.f32 %v446
        %v448 = vadd.f32 %v420, %v447
        %449 = vset.pattern.permute.xlu0 24
        %450 = vperm.xlu0 %449, %v278
        %v451 = vpop.permute.xlu0 %450
        %vm452 = vcmp.eq.s32.totalorder %v280, %v451
        %v453 = vsel %vm452, 1, 0
        %v454 = vcvt.s32.f32 %v453
        %v455 = vadd.f32 %v427, %v454
        %456 = vset.pattern.permute.xlu0 25
        %457 = vperm.xlu0 %456, %v278
        %v458 = vpop.permute.xlu0 %457
        %vm459 = vcmp.eq.s32.totalorder %v280, %v458
        %v460 = vsel %vm459, 1, 0
        %v461 = vcvt.s32.f32 %v460
        %v462 = vadd.f32 %v434, %v461
        %463 = vset.pattern.permute.xlu0 26
        %464 = vperm.xlu0 %463, %v278
        %v465 = vpop.permute.xlu0 %464
        %vm466 = vcmp.eq.s32.totalorder %v280, %v465
        %v467 = vsel %vm466, 1, 0
        %v468 = vcvt.s32.f32 %v467
        %v469 = vadd.f32 %v441, %v468
        %470 = vset.pattern.permute.xlu0 27
        %471 = vperm.xlu0 %470, %v278
        %v472 = vpop.permute.xlu0 %471
        %vm473 = vcmp.eq.s32.totalorder %v280, %v472
        %v474 = vsel %vm473, 1, 0
        %v475 = vcvt.s32.f32 %v474
        %v476 = vadd.f32 %v448, %v475
        %477 = vset.pattern.permute.xlu0 28
        %478 = vperm.xlu0 %477, %v278
        %v479 = vpop.permute.xlu0 %478
        %vm480 = vcmp.eq.s32.totalorder %v280, %v479
        %v481 = vsel %vm480, 1, 0
        %v482 = vcvt.s32.f32 %v481
        %v483 = vadd.f32 %v455, %v482
        %484 = vset.pattern.permute.xlu0 29
        %485 = vperm.xlu0 %484, %v278
        %v486 = vpop.permute.xlu0 %485
        %vm487 = vcmp.eq.s32.totalorder %v280, %v486
        %v488 = vsel %vm487, 1, 0
        %v489 = vcvt.s32.f32 %v488
        %v490 = vadd.f32 %v462, %v489
        %491 = vset.pattern.permute.xlu0 30
        %492 = vperm.xlu0 %491, %v278
        %v493 = vpop.permute.xlu0 %492
        %vm494 = vcmp.eq.s32.totalorder %v280, %v493
        %v495 = vsel %vm494, 1, 0
        %v496 = vcvt.s32.f32 %v495
        %v497 = vadd.f32 %v469, %v496
        %498 = vset.pattern.permute.xlu0 31
        %499 = vperm.xlu0 %498, %v278
        %v500 = vpop.permute.xlu0 %499
        %vm501 = vcmp.eq.s32.totalorder %v280, %v500
        %v502 = vsel %vm501, 1, 0
        %v503 = vcvt.s32.f32 %v502
        %v504 = vadd.f32 %v476, %v503
        %v505 = vadd.f32 %v483, %v490
        %v506 = vadd.f32 %v497, %v504
        %v507 = vadd.f32 %v505, %v506
        %v508 = vpack.c.bf16 %v507, %v507
        %v509 = vld [vmem:[%s1] sm:$0xf]
        %v510 = vld [vmem:[%s1 + $0x4] sm:$0xf]
        %v511 = vld [vmem:[%s1 + $0x8] sm:$0xf]
        %v512 = vld [vmem:[%s1 + $0xc] sm:$0xf]
        %v513 = vld [vmem:[%s1 + $0x10] sm:$0xf]
        %v514 = vld [vmem:[%s1 + $0x14] sm:$0xf]
        %v515 = vld [vmem:[%s1 + $0x18] sm:$0xf]
        %v516 = vld [vmem:[%s1 + $0x1c] sm:$0xf]
        %v517 = vld [vmem:[%s1 + $0x20] sm:$0xf]
        %v518 = vld [vmem:[%s1 + $0x24] sm:$0xf]
        %v519 = vld [vmem:[%s1 + $0x28] sm:$0xf]
        %v520 = vld [vmem:[%s1 + $0x2c] sm:$0xf]
        %v521 = vld [vmem:[%s1 + $0x30] sm:$0xf]
        %v522 = vld [vmem:[%s1 + $0x34] sm:$0xf]
        %v523 = vld [vmem:[%s1 + $0x38] sm:$0xf]
        %v524 = vld [vmem:[%s1 + $0x3c] sm:$0xf]
        %v541 = vunpack.c.l.b16 %v509
        %v542 = vunpack.c.l.b16 %v510
        %v543 = vunpack.c.l.b16 %v511
        %v544 = vunpack.c.l.b16 %v512
        %v545 = vunpack.c.l.b16 %v513
        %v546 = vunpack.c.l.b16 %v514
        %v547 = vunpack.c.l.b16 %v515
        %v548 = vunpack.c.l.b16 %v516
        %v549 = vunpack.c.l.b16 %v517
        %v550 = vunpack.c.l.b16 %v518
        %v551 = vunpack.c.l.b16 %v519
        %v552 = vunpack.c.l.b16 %v520
        %v553 = vunpack.c.l.b16 %v521
        %v554 = vunpack.c.l.b16 %v522
        %v555 = vunpack.c.l.b16 %v523
        %v556 = vunpack.c.l.b16 %v524
        %v557 = vpack.c.b16 %v542, %v541
        %v558 = vpack.c.b16 %v544, %v543
        %v559 = vpack.c.b16 %v546, %v545
        %v560 = vpack.c.b16 %v548, %v547
        %v561 = vpack.c.b16 %v550, %v549
        %v562 = vpack.c.b16 %v552, %v551
        %v563 = vpack.c.b16 %v554, %v553
        %v564 = vpack.c.b16 %v556, %v555
        %573 = vmatprep.subr.bf16.mxu0 0
        %574 = vmatpush1.bf16.msra.mxu0 %v564
        %575 = vmatprep.subr.bf16.mxu0 0
        %576 = vmatpush1.bf16.msra.mxu0 %v563
        %577 = vmatprep.subr.bf16.mxu0 0
        %578 = vmatpush1.bf16.msra.mxu0 %v562
        %579 = vmatprep.subr.bf16.mxu0 0
        %580 = vmatpush1.bf16.msra.mxu0 %v561
        %581 = vmatprep.subr.bf16.mxu0 0
        %582 = vmatpush1.bf16.msra.mxu0 %v560
        %583 = vmatprep.subr.bf16.mxu0 0
        %584 = vmatpush1.bf16.msra.mxu0 %v559
        %585 = vmatprep.subr.bf16.mxu0 0
        %586 = vmatpush1.bf16.msra.mxu0 %v558
        %587 = vmatprep.subr.bf16.mxu0 0
        %588 = vmatpush1.bf16.msra.mxu0 %v557
        %589 = vmatprep.subr.bf16.mxu0 0
        %590 = vmatpush2.bf16.msra.mxu0 0
        %591 = vmatprep.subr.bf16.mxu0 0
        %592 = vmatpush2.bf16.msra.mxu0 0
        %593 = vmatprep.subr.bf16.mxu0 0
        %594 = vmatpush2.bf16.msra.mxu0 0
        %595 = vmatprep.subr.bf16.mxu0 0
        %596 = vmatpush2.bf16.msra.mxu0 0
        %597 = vmatprep.subr.bf16.mxu0 0
        %598 = vmatpush2.bf16.msra.mxu0 0
        %599 = vmatprep.subr.bf16.mxu0 0
        %600 = vmatpush2.bf16.msra.mxu0 0
        %601 = vmatprep.subr.bf16.mxu0 0
        %602 = vmatpush2.bf16.msra.mxu0 0
        %603 = vmatprep.subr.bf16.mxu0 0
        %604 = vmatpush2.bf16.msra.mxu0 0
        %605 = vmatprep.mubr.bf16.mxu0 0
        %606 = vmatmul.mubr.bf16.gmra.mxu0 %v508
        %v607 = vpop.f32.mrf.mxu0
        %v608 = vadd.f32 0.0, %v607
        %v609 = vpop.f32.mrf.mxu0
        %v610 = vpop.f32.mrf.mxu0
        %v611 = vpop.f32.mrf.mxu0
        %612 = vdwg.mxu0
        %v613 = vpack.c.bf16 %v608, %v608
        %v614 = vld [vmem:[%s2] sm:$0xf]
        %v615 = vld [vmem:[%s2 + $0x4] sm:$0xf]
        %v616 = vld [vmem:[%s2 + $0x8] sm:$0xf]
        %v617 = vld [vmem:[%s2 + $0xc] sm:$0xf]
        %v618 = vld [vmem:[%s2 + $0x10] sm:$0xf]
        %v619 = vld [vmem:[%s2 + $0x14] sm:$0xf]
        %v620 = vld [vmem:[%s2 + $0x18] sm:$0xf]
        %v621 = vld [vmem:[%s2 + $0x1c] sm:$0xf]
        %v622 = vld [vmem:[#allocation4] sm:$0x1]
        %v623 = vlaneseq
        %v624 = vshrl.u32 %v623, 7
        %v625 = vsub.s32 0, %v624
        %v626 = vrot.slane %v622, %v625
        %v635 = vunpack.c.l.b16 %v614
        %v636 = vunpack.c.l.b16 %v615
        %v637 = vunpack.c.l.b16 %v616
        %v638 = vunpack.c.l.b16 %v617
        %v639 = vunpack.c.l.b16 %v618
        %v640 = vunpack.c.l.b16 %v619
        %v641 = vunpack.c.l.b16 %v620
        %v642 = vunpack.c.l.b16 %v621
        %v643 = vpack.c.b16 %v636, %v635
        %v644 = vpack.c.b16 %v638, %v637
        %v645 = vpack.c.b16 %v640, %v639
        %v646 = vpack.c.b16 %v642, %v641
        %vm651 = vcmask 523264
        %v653 = vsel %vm651, %v613, 0
        %655 = vmatprep.subr.bf16.mxu0 0
        %656 = vmatpush1.bf16.msra.mxu0 0
        %657 = vmatprep.subr.bf16.mxu0 0
        %658 = vmatpush1.bf16.msra.mxu0 0
        %659 = vmatprep.subr.bf16.mxu0 0
        %660 = vmatpush1.bf16.msra.mxu0 0
        %661 = vmatprep.subr.bf16.mxu0 0
        %662 = vmatpush1.bf16.msra.mxu0 0
        %663 = vmatprep.subr.bf16.mxu0 0
        %664 = vmatpush1.bf16.msra.mxu0 %v646
        %665 = vmatprep.subr.bf16.mxu0 0
        %666 = vmatpush1.bf16.msra.mxu0 %v645
        %667 = vmatprep.subr.bf16.mxu0 0
        %668 = vmatpush1.bf16.msra.mxu0 %v644
        %669 = vmatprep.subr.bf16.mxu0 0
        %670 = vmatpush1.bf16.msra.mxu0 %v643
        %671 = vmatprep.subr.bf16.mxu0 0
        %672 = vmatpush2.bf16.msra.mxu0 0
        %673 = vmatprep.subr.bf16.mxu0 0
        %674 = vmatpush2.bf16.msra.mxu0 0
        %675 = vmatprep.subr.bf16.mxu0 0
        %676 = vmatpush2.bf16.msra.mxu0 0
        %677 = vmatprep.subr.bf16.mxu0 0
        %678 = vmatpush2.bf16.msra.mxu0 0
        %679 = vmatprep.subr.bf16.mxu0 0
        %680 = vmatpush2.bf16.msra.mxu0 0
        %681 = vmatprep.subr.bf16.mxu0 0
        %682 = vmatpush2.bf16.msra.mxu0 0
        %683 = vmatprep.subr.bf16.mxu0 0
        %684 = vmatpush2.bf16.msra.mxu0 0
        %685 = vmatprep.subr.bf16.mxu0 0
        %686 = vmatpush2.bf16.msra.mxu0 0
        %687 = vmatprep.mubr.bf16.mxu0 0
        %688 = vmatmul.mubr.bf16.gmra.mxu0 %v653
        %v689 = vpop.f32.mrf.mxu0
        %v690 = vadd.f32 %v626, %v689
        %v691 = vpop.f32.mrf.mxu0
        %v692 = vpop.f32.mrf.mxu0
        %v693 = vpop.f32.mrf.mxu0
        %694 = vdwg.mxu0
        %v695 = vpack.c.bf16 %v690, %v690
        %v696 = vld [vmem:[#allocation2] sm:$0xff]
        %v697 = vld [vmem:[#allocation2 + $0x8] sm:$0xff]
        %v698 = vld [vmem:[#allocation2 + $0x10] sm:$0xff]
        %v699 = vld [vmem:[#allocation2 + $0x18] sm:$0xff]
        %s700 = scalar_lea.vmem [#allocation4], 1
        %v701 = vld [vmem:[%s700] ss:$4 sm:$0x3]
        %v703 = vlaneseq
        %v704 = vshrl.u32 %v703, 7
        %v705 = vsub.s32 0, %v704
        %v706 = vrot.slane %v701, %v705
        %v707 = vlaneseq
        %v708 = vshrl.u32 %v707, 7
        %v709 = vsub.s32 1, %v708
        %v710 = vrot.slane %v701, %v709
        %v717 = vunpack.c.l.b16 %v696
        %v718 = vunpack.c.h.b16 %v696
        %v719 = vunpack.c.l.b16 %v697
        %v720 = vunpack.c.h.b16 %v697
        %v721 = vunpack.c.l.b16 %v698
        %v722 = vunpack.c.h.b16 %v698
        %v723 = vunpack.c.l.b16 %v699
        %v724 = vunpack.c.h.b16 %v699
        %v725 = vpack.c.b16 %v719, %v717
        %v726 = vpack.c.b16 %v720, %v718
        %v727 = vpack.c.b16 %v723, %v721
        %v728 = vpack.c.b16 %v724, %v722
        %vm733 = vcmask 261120
        %v735 = vsel %vm733, %v695, 0
        %737 = vmatprep.subr.bf16.mxu0 0
        %738 = vmatpush1.bf16.msra.mxu0 0
        %739 = vmatprep.subr.bf16.mxu0 0
        %740 = vmatpush1.bf16.msra.mxu0 0
        %741 = vmatprep.subr.bf16.mxu0 0
        %742 = vmatpush1.bf16.msra.mxu0 0
        %743 = vmatprep.subr.bf16.mxu0 0
        %744 = vmatpush1.bf16.msra.mxu0 0
        %745 = vmatprep.subr.bf16.mxu0 0
        %746 = vmatpush1.bf16.msra.mxu0 0
        %747 = vmatprep.subr.bf16.mxu0 0
        %748 = vmatpush1.bf16.msra.mxu0 0
        %749 = vmatprep.subr.bf16.mxu0 %v728
        %750 = vmatpush1.bf16.msra.mxu0 %v727
        %751 = vmatprep.subr.bf16.mxu0 %v726
        %752 = vmatpush1.bf16.msra.mxu0 %v725
        %753 = vmatprep.subr.bf16.mxu0 0
        %754 = vmatpush2.bf16.msra.mxu0 0
        %755 = vmatprep.subr.bf16.mxu0 0
        %756 = vmatpush2.bf16.msra.mxu0 0
        %757 = vmatprep.subr.bf16.mxu0 0
        %758 = vmatpush2.bf16.msra.mxu0 0
        %759 = vmatprep.subr.bf16.mxu0 0
        %760 = vmatpush2.bf16.msra.mxu0 0
        %761 = vmatprep.subr.bf16.mxu0 0
        %762 = vmatpush2.bf16.msra.mxu0 0
        %763 = vmatprep.subr.bf16.mxu0 0
        %764 = vmatpush2.bf16.msra.mxu0 0
        %765 = vmatprep.subr.bf16.mxu0 0
        %766 = vmatpush2.bf16.msra.mxu0 0
        %767 = vmatprep.subr.bf16.mxu0 0
        %768 = vmatpush2.bf16.msra.mxu0 0
        %769 = vmatprep.mubr.bf16.mxu0 0
        %770 = vmatmul.mubr.bf16.gmra.mxu0 %v735
        %v771 = vpop.f32.mrf.mxu0
        %v772 = vadd.f32 %v706, %v771
        %v773 = vpop.f32.mrf.mxu0
        %v774 = vadd.f32 %v710, %v773
        %v775 = vpop.f32.mrf.mxu0
        %v776 = vpop.f32.mrf.mxu0
        %777 = vdwg.mxu0
        %v778 = vmax.f32 %v772, 0.0
        %v779 = vmax.f32 %v774, 0.0
        %v780 = vpack.c.bf16 %v778, %v778
        %v781 = vpack.c.bf16 %v779, %v779
        %v782 = vld [vmem:[%s4] sm:$0xf]
        %v783 = vld [vmem:[%s4 + $0x4] sm:$0xf]
        %v784 = vld [vmem:[%s4 + $0x8] sm:$0xf]
        %v785 = vld [vmem:[%s4 + $0xc] sm:$0xf]
        %v786 = vld [vmem:[%s4 + $0x10] sm:$0xf]
        %v787 = vld [vmem:[%s4 + $0x14] sm:$0xf]
        %v788 = vld [vmem:[%s4 + $0x18] sm:$0xf]
        %v789 = vld [vmem:[%s4 + $0x1c] sm:$0xf]
        %v790 = vld [vmem:[%s4 + $0x20] sm:$0xf]
        %v791 = vld [vmem:[%s4 + $0x24] sm:$0xf]
        %v792 = vld [vmem:[%s4 + $0x28] sm:$0xf]
        %v793 = vld [vmem:[%s4 + $0x2c] sm:$0xf]
        %v794 = vld [vmem:[%s4 + $0x30] sm:$0xf]
        %v795 = vld [vmem:[%s4 + $0x34] sm:$0xf]
        %v796 = vld [vmem:[%s4 + $0x38] sm:$0xf]
        %v797 = vld [vmem:[%s4 + $0x3c] sm:$0xf]
        %v798 = vld [vmem:[#allocation4 + $0x2] sm:$0x1]
        %v799 = vlaneseq
        %v800 = vshrl.u32 %v799, 7
        %v801 = vsub.s32 0, %v800
        %v802 = vrot.slane %v798, %v801
        %v819 = vunpack.c.l.b16 %v782
        %v820 = vunpack.c.l.b16 %v783
        %v821 = vunpack.c.l.b16 %v784
        %v822 = vunpack.c.l.b16 %v785
        %v823 = vunpack.c.l.b16 %v786
        %v824 = vunpack.c.l.b16 %v787
        %v825 = vunpack.c.l.b16 %v788
        %v826 = vunpack.c.l.b16 %v789
        %v827 = vunpack.c.l.b16 %v790
        %v828 = vunpack.c.l.b16 %v791
        %v829 = vunpack.c.l.b16 %v792
        %v830 = vunpack.c.l.b16 %v793
        %v831 = vunpack.c.l.b16 %v794
        %v832 = vunpack.c.l.b16 %v795
        %v833 = vunpack.c.l.b16 %v796
        %v834 = vunpack.c.l.b16 %v797
        %v835 = vpack.c.b16 %v820, %v819
        %v836 = vpack.c.b16 %v822, %v821
        %v837 = vpack.c.b16 %v824, %v823
        %v838 = vpack.c.b16 %v826, %v825
        %v839 = vpack.c.b16 %v828, %v827
        %v840 = vpack.c.b16 %v830, %v829
        %v841 = vpack.c.b16 %v832, %v831
        %v842 = vpack.c.b16 %v834, %v833
        %851 = vmatprep.subr.bf16.mxu0 0
        %852 = vmatpush1.bf16.msra.mxu0 %v842
        %853 = vmatprep.subr.bf16.mxu0 0
        %854 = vmatpush1.bf16.msra.mxu0 %v841
        %855 = vmatprep.subr.bf16.mxu0 0
        %856 = vmatpush1.bf16.msra.mxu0 %v840
        %857 = vmatprep.subr.bf16.mxu0 0
        %858 = vmatpush1.bf16.msra.mxu0 %v839
        %859 = vmatprep.subr.bf16.mxu0 0
        %860 = vmatpush1.bf16.msra.mxu0 %v838
        %861 = vmatprep.subr.bf16.mxu0 0
        %862 = vmatpush1.bf16.msra.mxu0 %v837
        %863 = vmatprep.subr.bf16.mxu0 0
        %864 = vmatpush1.bf16.msra.mxu0 %v836
        %865 = vmatprep.subr.bf16.mxu0 0
        %866 = vmatpush1.bf16.msra.mxu0 %v835
        %867 = vmatprep.subr.bf16.mxu0 0
        %868 = vmatpush2.bf16.msra.mxu0 0
        %869 = vmatprep.subr.bf16.mxu0 0
        %870 = vmatpush2.bf16.msra.mxu0 0
        %871 = vmatprep.subr.bf16.mxu0 0
        %872 = vmatpush2.bf16.msra.mxu0 0
        %873 = vmatprep.subr.bf16.mxu0 0
        %874 = vmatpush2.bf16.msra.mxu0 0
        %875 = vmatprep.subr.bf16.mxu0 0
        %876 = vmatpush2.bf16.msra.mxu0 0
        %877 = vmatprep.subr.bf16.mxu0 0
        %878 = vmatpush2.bf16.msra.mxu0 0
        %879 = vmatprep.subr.bf16.mxu0 0
        %880 = vmatpush2.bf16.msra.mxu0 0
        %881 = vmatprep.subr.bf16.mxu0 0
        %882 = vmatpush2.bf16.msra.mxu0 0
        %883 = vmatprep.mubr.bf16.mxu0 0
        %884 = vmatmul.mubr.bf16.gmra.mxu0 %v780
        %v885 = vpop.f32.mrf.mxu0
        %v886 = vadd.f32 %v802, %v885
        %v887 = vpop.f32.mrf.mxu0
        %v888 = vpop.f32.mrf.mxu0
        %v889 = vpop.f32.mrf.mxu0
        %890 = vdwg.mxu0
        %891 = vst [vmem:[%s276] sm:$0xff] %v886
        %s892 = scalar_lea.vmem %s4, 64
        %v893 = vld [vmem:[%s892] sm:$0xf]
        %v894 = vld [vmem:[%s892 + $0x4] sm:$0xf]
        %v895 = vld [vmem:[%s892 + $0x8] sm:$0xf]
        %v896 = vld [vmem:[%s892 + $0xc] sm:$0xf]
        %v897 = vld [vmem:[%s892 + $0x10] sm:$0xf]
        %v898 = vld [vmem:[%s892 + $0x14] sm:$0xf]
        %v899 = vld [vmem:[%s892 + $0x18] sm:$0xf]
        %v900 = vld [vmem:[%s892 + $0x1c] sm:$0xf]
        %v901 = vld [vmem:[%s892 + $0x20] sm:$0xf]
        %v902 = vld [vmem:[%s892 + $0x24] sm:$0xf]
        %v903 = vld [vmem:[%s892 + $0x28] sm:$0xf]
        %v904 = vld [vmem:[%s892 + $0x2c] sm:$0xf]
        %v905 = vld [vmem:[%s892 + $0x30] sm:$0xf]
        %v906 = vld [vmem:[%s892 + $0x34] sm:$0xf]
        %v907 = vld [vmem:[%s892 + $0x38] sm:$0xf]
        %v908 = vld [vmem:[%s892 + $0x3c] sm:$0xf]
        %v909 = vld [vmem:[#allocation4 + $0x6] sm:$0x1]
        %v910 = vlaneseq
        %v911 = vshrl.u32 %v910, 7
        %v912 = vsub.s32 0, %v911
        %v913 = vrot.slane %v909, %v912
        %v930 = vunpack.c.l.b16 %v893
        %v931 = vunpack.c.l.b16 %v894
        %v932 = vunpack.c.l.b16 %v895
        %v933 = vunpack.c.l.b16 %v896
        %v934 = vunpack.c.l.b16 %v897
        %v935 = vunpack.c.l.b16 %v898
        %v936 = vunpack.c.l.b16 %v899
        %v937 = vunpack.c.l.b16 %v900
        %v938 = vunpack.c.l.b16 %v901
        %v939 = vunpack.c.l.b16 %v902
        %v940 = vunpack.c.l.b16 %v903
        %v941 = vunpack.c.l.b16 %v904
        %v942 = vunpack.c.l.b16 %v905
        %v943 = vunpack.c.l.b16 %v906
        %v944 = vunpack.c.l.b16 %v907
        %v945 = vunpack.c.l.b16 %v908
        %v946 = vpack.c.b16 %v931, %v930
        %v947 = vpack.c.b16 %v933, %v932
        %v948 = vpack.c.b16 %v935, %v934
        %v949 = vpack.c.b16 %v937, %v936
        %v950 = vpack.c.b16 %v939, %v938
        %v951 = vpack.c.b16 %v941, %v940
        %v952 = vpack.c.b16 %v943, %v942
        %v953 = vpack.c.b16 %v945, %v944
        %962 = vmatprep.subr.bf16.mxu0 0
        %963 = vmatpush1.bf16.msra.mxu0 %v953
        %964 = vmatprep.subr.bf16.mxu0 0
        %965 = vmatpush1.bf16.msra.mxu0 %v952
        %966 = vmatprep.subr.bf16.mxu0 0
        %967 = vmatpush1.bf16.msra.mxu0 %v951
        %968 = vmatprep.subr.bf16.mxu0 0
        %969 = vmatpush1.bf16.msra.mxu0 %v950
        %970 = vmatprep.subr.bf16.mxu0 0
        %971 = vmatpush1.bf16.msra.mxu0 %v949
        %972 = vmatprep.subr.bf16.mxu0 0
        %973 = vmatpush1.bf16.msra.mxu0 %v948
        %974 = vmatprep.subr.bf16.mxu0 0
        %975 = vmatpush1.bf16.msra.mxu0 %v947
        %976 = vmatprep.subr.bf16.mxu0 0
        %977 = vmatpush1.bf16.msra.mxu0 %v946
        %978 = vmatprep.subr.bf16.mxu0 0
        %979 = vmatpush2.bf16.msra.mxu0 0
        %980 = vmatprep.subr.bf16.mxu0 0
        %981 = vmatpush2.bf16.msra.mxu0 0
        %982 = vmatprep.subr.bf16.mxu0 0
        %983 = vmatpush2.bf16.msra.mxu0 0
        %984 = vmatprep.subr.bf16.mxu0 0
        %985 = vmatpush2.bf16.msra.mxu0 0
        %986 = vmatprep.subr.bf16.mxu0 0
        %987 = vmatpush2.bf16.msra.mxu0 0
        %988 = vmatprep.subr.bf16.mxu0 0
        %989 = vmatpush2.bf16.msra.mxu0 0
        %990 = vmatprep.subr.bf16.mxu0 0
        %991 = vmatpush2.bf16.msra.mxu0 0
        %992 = vmatprep.subr.bf16.mxu0 0
        %993 = vmatpush2.bf16.msra.mxu0 0
        %994 = vmatprep.mubr.bf16.mxu0 0
        %995 = vmatmul.mubr.bf16.gmra.mxu0 %v781
        %v996 = vpop.f32.mrf.mxu0
        %v997 = vadd.f32 %v913, %v996
        %v998 = vpop.f32.mrf.mxu0
        %v999 = vpop.f32.mrf.mxu0
        %v1000 = vpop.f32.mrf.mxu0
        %1001 = vdwg.mxu0
        %1002 = vst [vmem:[%s276 + $0x8] sm:$0xff] %v997
        %p1003 = scmp.lt.s32.totalorder %s19, 1
        %s1004 = scalar_select %p1003, %s19, 1
        %s1005 = smul.addr %s1004, 2
        %s1006 = smul.addr %s1005, 8
        %s1007 = scalar_lea.vmem %s6, %s1006
        // Predicated region
        $region53: #{dualnn_forward.1} parent=43 // pred_check
          %p1008 = pneg %p168
        $region54: #{dualnn_forward.1} parent=43 // pred_check_branch
          %1010 = sbr.rel (%p1008) target = $region56
        $region55: #{dualnn_forward.1} parent=43 // pred_region
          _
        $region56: #{dualnn_forward.1} parent=43 // pred_fallthru
          _
      $region44: #{dualnn_forward.1} parent=5 // pred_fallthru
        _
      %p1011 = scmp.le.s32.totalorder 2, %s14
      // Predicated region
      $region57: #{dualnn_forward.1} parent=5 // pred_check
        %p1012 = pneg %p1011
      $region58: #{dualnn_forward.1} parent=5 // pred_check_branch
        %1014 = sbr.rel (%p1012) target = $region60
      $region59: #{dualnn_forward.1} parent=5 // pred_region
        %s1015 = ssub.s32 %s14, 2
        // Predicated region
        $region61: #{dualnn_forward.1} parent=59 // pred_check
          %p1016 = pneg %p174
        $region62: #{dualnn_forward.1} parent=59 // pred_check_branch
          %1018 = sbr.rel (%p1016) target = $region64
        $region63: #{dualnn_forward.1} parent=59 // pred_region
          %p1019 = scmp.lt.s32.totalorder %s20, 1
          %s1020 = scalar_select %p1019, %s20, 1
          %s1021 = smul.addr %s1020, 2
          %s1022 = smul.addr %s1021, 8
          %s1023 = scalar_lea.vmem %s6, %s1022
        $region64: #{dualnn_forward.1} parent=59 // pred_fallthru
          _
      $region60: #{dualnn_forward.1} parent=5 // pred_fallthru
        _
    $region6: #{dualnn_forward.1} parent=1 // loop_footer
      %s18 = sadd.s32 1, %s14
    $region7: #{dualnn_forward.1} parent=1 // loop_footer_branch
      %13 = sbr.rel target = $region3
    $region8: #{dualnn_forward.1} parent=1 // loop_exit
      _
    %1024 = vsyncpa [#allocation3], 1
    %s1025 = scalar_lea.sflag [#allocation3], 1
    %1026 = vsyncpa %s1025, 1
    %1027 = vsyncpa [#allocation5], 1

</llo_original>
